<compile_context>
chip_gen: v7x
topology: tpu7x:2x2x1
jax: 0.10.0
libtpu: 0.0.40
codegen_flags: <defaults>
</compile_context>

<pallas_src>
import jax
import jax.numpy as jnp
from jax.experimental import pallas as pl
from jax.experimental.pallas import tpu as pltpu

LANE = 128
SUBLANE = 8
MAX_BLOCK_B = 8192  # keeps double-buffered tiles well inside 32 MiB scoped VMEM


def attention_mlp_kernel(x_ref, w1_ref, b1_ref, w2_ref, b2_ref, o_ref):
    # Layer 1: Linear + ReLU (MXU matmul with f32 accumulation, VPU elementwise).
    h = jnp.dot(x_ref[...], w1_ref[...], preferred_element_type=jnp.float32)
    h = jnp.maximum(h + b1_ref[...], 0.0)

    # Layer 2: Linear (real F2 columns only - no lane padding).
    logits = jnp.dot(h, w2_ref[...], preferred_element_type=jnp.float32)
    logits = logits + b2_ref[...]

    # Numerically-stable softmax over the feature axis (PyTorch dim=1), all f32.
    # Exact normalization (no approx reciprocal) so rows sum to 1.
    m = jnp.max(logits, axis=1, keepdims=True)
    e = jnp.exp(logits - m)
    denom = jnp.sum(e, axis=1, keepdims=True)
    o_ref[...] = (e / denom).astype(o_ref.dtype)


def attention_network(x, w1, b1, w2, b2, *, block_b=8192):
    """softmax(relu(x @ w1 + b1) @ w2 + b2, axis=1); x: (B, F0) float32."""
    B, F0 = x.shape
    F1 = w1.shape[1]
    F2 = w2.shape[1]
    b1 = b1.reshape(1, F1)
    b2 = b2.reshape(1, F2)

    # Batch tile: multiple of 8 sublanes, capped for VMEM safety on all gens.
    TB = max(SUBLANE, min(block_b, MAX_BLOCK_B))
    TB = pl.cdiv(TB, SUBLANE) * SUBLANE

    if B <= TB and B < 4 * SUBLANE:
        # Tiny batch: grid-free call, whole arrays as single VMEM blocks.
        return pl.pallas_call(
            attention_mlp_kernel,
            out_shape=jax.ShapeDtypeStruct((B, F2), jnp.float32),
            in_specs=[pl.BlockSpec(memory_space=pltpu.MemorySpace.VMEM)] * 5,
            out_specs=pl.BlockSpec(memory_space=pltpu.MemorySpace.VMEM),
        )(x, w1, b1, w2, b2)

    if B <= TB:
        # Fits in one tile but is big enough to split: guarantee >=2 grid steps
        # so v7x's second TensorCore is not idle (neutral on v5e/v6e).
        TB = pl.cdiv(pl.cdiv(B, 2), SUBLANE) * SUBLANE
    num_tiles = pl.cdiv(B, TB)

    # Tile ONLY the batch axis.  Weights/biases use constant index_maps so
    # they are DMA'd once and stay VMEM-resident.  The (possibly partial) last
    # batch tile reads some out-of-bounds rows; their results are never
    # written back (writes past B are dropped) and softmax is per-row, so the
    # real output is unaffected.
    return pl.pallas_call(
        attention_mlp_kernel,
        out_shape=jax.ShapeDtypeStruct((B, F2), jnp.float32),
        grid=(num_tiles,),
        in_specs=[
            pl.BlockSpec((TB, F0), lambda i: (i, 0)),
            pl.BlockSpec((F0, F1), lambda i: (0, 0)),
            pl.BlockSpec((1, F1), lambda i: (0, 0)),
            pl.BlockSpec((F1, F2), lambda i: (0, 0)),
            pl.BlockSpec((1, F2), lambda i: (0, 0)),
        ],
        out_specs=pl.BlockSpec((TB, F2), lambda i: (i, 0)),
        compiler_params=pltpu.CompilerParams(
            dimension_semantics=("parallel",),
        ),
    )(x, w1, b1, w2, b2)


def reference(x, w1, b1, w2, b2):
    h = jnp.maximum(x @ w1 + b1.reshape(1, -1), 0.0)
    logits = h @ w2 + b2.reshape(1, -1)
    return jax.nn.softmax(logits, axis=1)


if __name__ == "__main__":
    # shape = (32, 64, 16): Linear(32->64) -> ReLU -> Linear(64->16) -> Softmax(dim=1)
    B, F0, F1, F2 = 8, 32, 64, 16

    key = jax.random.PRNGKey(0)
    kx, kw1, kb1, kw2, kb2 = jax.random.split(key, 5)

    x = jax.random.normal(kx, (B, F0), dtype=jnp.float32)
    # Deterministic synthetic weights stored as (f_in, f_out): x @ W + b.
    w1 = jax.random.normal(kw1, (F0, F1), dtype=jnp.float32) * (1.0 / jnp.sqrt(F0))
    b1 = jax.random.normal(kb1, (1, F1), dtype=jnp.float32) * 0.1
    w2 = jax.random.normal(kw2, (F1, F2), dtype=jnp.float32) * (1.0 / jnp.sqrt(F1))
    b2 = jax.random.normal(kb2, (1, F2), dtype=jnp.float32) * 0.1

    # --- tiny batch: grid-free single-block path ---
    out = jax.block_until_ready(attention_network(x, w1, b1, w2, b2))
    ref = reference(x, w1, b1, w2, b2)
    assert out.shape == (B, F2)
    assert jnp.allclose(out, ref, atol=2e-3, rtol=2e-3), "mismatch vs reference (small)"
    assert jnp.allclose(jnp.sum(out, axis=1), 1.0, atol=2e-3)

    # --- ragged batch, small tile: >2 grid steps with a partial last tile ---
    B2 = 200
    x2 = jax.random.normal(jax.random.PRNGKey(1), (B2, F0), dtype=jnp.float32)
    out2 = jax.block_until_ready(attention_network(x2, w1, b1, w2, b2, block_b=64))
    ref2 = reference(x2, w1, b1, w2, b2)
    assert out2.shape == (B2, F2)
    assert jnp.allclose(out2, ref2, atol=2e-3, rtol=2e-3), "mismatch vs reference (tiled)"
    assert jnp.allclose(jnp.sum(out2, axis=1), 1.0, atol=2e-3)

    # --- ragged batch, default tile: exercises the 2-way split (v7x) branch ---
    out3 = jax.block_until_ready(attention_network(x2, w1, b1, w2, b2))
    assert out3.shape == (B2, F2)
    assert jnp.allclose(out3, ref2, atol=2e-3, rtol=2e-3), "mismatch vs reference (split)"
    assert jnp.allclose(jnp.sum(out3, axis=1), 1.0, atol=2e-3)

    print("KERNEL_OK")
</pallas_src>

<mosaic_0001>
module attributes {stable_mosaic.version = 11 : i64} {
  func.func @attention_mlp_kernel(%arg0: memref<8x32xf32, #tpu.memory_space<vmem>>, %arg1: memref<32x64xf32, #tpu.memory_space<vmem>>, %arg2: memref<1x64xf32, #tpu.memory_space<vmem>>, %arg3: memref<64x16xf32, #tpu.memory_space<vmem>>, %arg4: memref<1x16xf32, #tpu.memory_space<vmem>>, %arg5: memref<8x16xf32, #tpu.memory_space<vmem>>) attributes {dimension_semantics = [], scalar_prefetch = 0 : i64, scratch_operands = 0 : i64, tpu.core_type = #tpu.core_type<tc>} {
    %c0 = arith.constant 0 : index
    %c0_0 = arith.constant 0 : index
    %0 = vector.load %arg0[%c0, %c0_0] : memref<8x32xf32, #tpu.memory_space<vmem>>, vector<8x32xf32>
    %c0_1 = arith.constant 0 : index
    %c0_2 = arith.constant 0 : index
    %1 = vector.load %arg1[%c0_1, %c0_2] : memref<32x64xf32, #tpu.memory_space<vmem>>, vector<32x64xf32>
    %cst = arith.constant dense<0.000000e+00> : vector<8x64xf32>
    %2 = tpu.matmul %0, %1, %cst {dimension_numbers = #tpu.dot_dimension_numbers<[1], [0], [0], [1], [0, 0, 1, 1], [], []>} : vector<8x32xf32>, vector<32x64xf32>, vector<8x64xf32> -> vector<8x64xf32>
    %c0_3 = arith.constant 0 : index
    %c0_4 = arith.constant 0 : index
    %3 = vector.load %arg2[%c0_3, %c0_4] : memref<1x64xf32, #tpu.memory_space<vmem>>, vector<1x64xf32>
    %4 = vector.broadcast %3 : vector<1x64xf32> to vector<8x64xf32>
    %5 = arith.addf %2, %4 : vector<8x64xf32>
    %cst_5 = arith.constant 0.000000e+00 : f32
    %6 = vector.broadcast %cst_5 : f32 to vector<8x64xf32>
    %7 = arith.maximumf %5, %6 : vector<8x64xf32>
    %c0_6 = arith.constant 0 : index
    %c0_7 = arith.constant 0 : index
    %8 = vector.load %arg3[%c0_6, %c0_7] : memref<64x16xf32, #tpu.memory_space<vmem>>, vector<64x16xf32>
    %cst_8 = arith.constant dense<0.000000e+00> : vector<8x16xf32>
    %9 = tpu.matmul %7, %8, %cst_8 {dimension_numbers = #tpu.dot_dimension_numbers<[1], [0], [0], [1], [0, 0, 1, 1], [], []>} : vector<8x64xf32>, vector<64x16xf32>, vector<8x16xf32> -> vector<8x16xf32>
    %c0_9 = arith.constant 0 : index
    %c0_10 = arith.constant 0 : index
    %10 = vector.load %arg4[%c0_9, %c0_10] : memref<1x16xf32, #tpu.memory_space<vmem>>, vector<1x16xf32>
    %11 = vector.broadcast %10 : vector<1x16xf32> to vector<8x16xf32>
    %12 = arith.addf %9, %11 : vector<8x16xf32>
    %cst_11 = arith.constant dense<0xFF800000> : vector<8xf32>
    %13 = vector.multi_reduction <maximumf>, %12, %cst_11 [1] : vector<8x16xf32> to vector<8xf32>
    %14 = vector.shape_cast %13 : vector<8xf32> to vector<8x1xf32>
    %15 = vector.broadcast %14 : vector<8x1xf32> to vector<8x16xf32>
    %16 = arith.subf %12, %15 : vector<8x16xf32>
    %17 = math.exp %16 : vector<8x16xf32>
    %cst_12 = arith.constant dense<0.000000e+00> : vector<8xf32>
    %18 = vector.multi_reduction <add>, %17, %cst_12 [1] : vector<8x16xf32> to vector<8xf32>
    %19 = vector.shape_cast %18 : vector<8xf32> to vector<8x1xf32>
    %20 = vector.broadcast %19 : vector<8x1xf32> to vector<8x16xf32>
    %21 = arith.divf %17, %20 : vector<8x16xf32>
    %c0_13 = arith.constant 0 : index
    %c0_14 = arith.constant 0 : index
    %22 = vector.load %arg5[%c0_13, %c0_14] : memref<8x16xf32, #tpu.memory_space<vmem>>, vector<8x16xf32>
    tpu.vector_store %arg5[%c0_13, %c0_14], %21 {strides = array<i32>} : memref<8x16xf32, #tpu.memory_space<vmem>>, vector<8x16xf32>,
    return
  }
}

</mosaic_0001>

<llo_original>
// kernel: tpu_custom_call.1
$region0: #{tpu_custom_call.1}
  #allocation0 [shape = 'u32[]', space=smem, size = 0x4, offset = 0x4, fixed_abs, tag = 'smem constant byte address 0x4 - core index']
  #allocation1 [shape = 'u32[144,128]{1,0:T(1,128)}', space=vmem, size = 0x12000, scoped, tag = 'internal scratch']
  %s0 = inlined_call_operand.vmem [shape: f32[8,32], index: 0, kind: input, shape index: {}]
  %s1 = inlined_call_operand.vmem [shape: f32[32,64], index: 1, kind: input, shape index: {}]
  %s2 = inlined_call_operand.vmem [shape: f32[1,64], index: 2, kind: input, shape index: {}]
  %s3 = inlined_call_operand.vmem [shape: f32[64,16], index: 3, kind: input, shape index: {}]
  %s4 = inlined_call_operand.vmem [shape: f32[1,16], index: 4, kind: input, shape index: {}]
  %s5 = inlined_call_operand.hbm [shape: f32[8,16], index: 5, kind: output, shape index: {}]
  %s6 = sld [smem:[#allocation0]]
  $region30: #{tpu_custom_call.1} parent=0
    _
  %s8 = ssub.s32 1, %s6
  %s9 = scalar_select 0, %s8, %s6
  $region1: #{tpu_custom_call.1} parent=0
    #allocation2 [shape = 'u8[4096]{0}', space=vmem, size = 0x1000, scoped, tag = 'output window, operand 0, single buffered']
    #allocation3 [shape = 's32[1]{0}', space=sflag, size = 0x4, scoped, tag = 'scoped memory for tpu_custom_call.1']
    %10 = vsyncpa [#allocation3], 0
    // Predicated region
    $region2: #{tpu_custom_call.1} parent=1 // pred_check
      _
    $region3: #{tpu_custom_call.1} parent=1 // pred_check_branch
      %12 = sbr.rel (0) target = $region5
    $region4: #{tpu_custom_call.1} parent=1 // pred_region
      _
    $region5: #{tpu_custom_call.1} parent=1 // pred_fallthru
      _
    // Predicated region
    $region6: #{tpu_custom_call.1} parent=1 // pred_check
      _
    $region7: #{tpu_custom_call.1} parent=1 // pred_check_branch
      %14 = sbr.rel (0) target = $region9
    $region8: #{tpu_custom_call.1} parent=1 // pred_region
      _
    $region9: #{tpu_custom_call.1} parent=1 // pred_fallthru
      _
    // Predicated region
    $region10: #{tpu_custom_call.1} parent=1 // pred_check
      _
    $region11: #{tpu_custom_call.1} parent=1 // pred_check_branch
      %16 = sbr.rel (0) target = $region13
    $region12: #{tpu_custom_call.1} parent=1 // pred_region
      _
    $region13: #{tpu_custom_call.1} parent=1 // pred_fallthru
      _
    // Predicated region
    $region14: #{tpu_custom_call.1} parent=1 // pred_check
      _
    $region15: #{tpu_custom_call.1} parent=1 // pred_check_branch
      %18 = sbr.rel (0) target = $region17
    $region16: #{tpu_custom_call.1} parent=1 // pred_region
      _
    $region17: #{tpu_custom_call.1} parent=1 // pred_fallthru
      _
    // Predicated region
    $region18: #{tpu_custom_call.1} parent=1 // pred_check
      _
    $region19: #{tpu_custom_call.1} parent=1 // pred_check_branch
      %20 = sbr.rel (0) target = $region21
    $region20: #{tpu_custom_call.1} parent=1 // pred_region
      _
    $region21: #{tpu_custom_call.1} parent=1 // pred_fallthru
      _
    %v21 = vld [vmem:[%s0] sm:$0xff]
    %v22 = vld [vmem:[%s1] sm:$0xff]
    %v23 = vld [vmem:[%s1 + $0x8] sm:$0xff]
    %v24 = vld [vmem:[%s1 + $0x10] sm:$0xff]
    %v25 = vld [vmem:[%s1 + $0x18] sm:$0xff]
    %v26 = vld [vmem:[%s2] sm:$0x1]
    %v28 = vlaneseq
    %v29 = vshrl.u32 %v28, 7
    %v30 = vsub.s32 0, %v29
    %v31 = vrot.slane %v26, %v30
    %vm33 = vcmask 261120
    %v35 = vsel %vm33, %v21, 0
    %37 = vmatprep.subr.mxu0 0.0
    %38 = vmatpush1.msra.mxu0 %v22
    %39 = vmatprep.subr.mxu0 0.0
    %40 = vmatpush1.msra.mxu0 %v23
    %41 = vmatprep.subr.mxu0 0.0
    %42 = vmatpush1.msra.mxu0 %v24
    %43 = vmatprep.subr.mxu0 0.0
    %44 = vmatpush1.msra.mxu0 %v25
    %45 = vmatprep.subr.mxu0 0.0
    %46 = vmatpush1.msra.mxu0 0.0
    %47 = vmatprep.subr.mxu0 0.0
    %48 = vmatpush1.msra.mxu0 0.0
    %49 = vmatprep.subr.mxu0 0.0
    %50 = vmatpush1.msra.mxu0 0.0
    %51 = vmatprep.subr.mxu0 0.0
    %52 = vmatpush1.msra.mxu0 0.0
    %53 = vmatprep.subr.mxu0 0.0
    %54 = vmatpush1.msra.mxu0 0.0
    %55 = vmatprep.subr.mxu0 0.0
    %56 = vmatpush1.msra.mxu0 0.0
    %57 = vmatprep.subr.mxu0 0.0
    %58 = vmatpush1.msra.mxu0 0.0
    %59 = vmatprep.subr.mxu0 0.0
    %60 = vmatpush1.msra.mxu0 0.0
    %61 = vmatprep.subr.mxu0 0.0
    %62 = vmatpush1.msra.mxu0 0.0
    %63 = vmatprep.subr.mxu0 0.0
    %64 = vmatpush1.msra.mxu0 0.0
    %65 = vmatprep.subr.mxu0 0.0
    %66 = vmatpush1.msra.mxu0 0.0
    %67 = vmatprep.subr.mxu0 0.0
    %68 = vmatpush1.msra.mxu0 0.0
    %69 = vmatprep.subr.mxu0 0.0
    %70 = vmatpush1.msra.mxu0 0.0
    %71 = vmatprep.subr.mxu0 0.0
    %72 = vmatpush1.msra.mxu0 0.0
    %73 = vmatprep.subr.mxu0 0.0
    %74 = vmatpush1.msra.mxu0 0.0
    %75 = vmatprep.subr.mxu0 0.0
    %76 = vmatpush1.msra.mxu0 0.0
    %77 = vmatprep.subr.mxu0 0.0
    %78 = vmatpush1.msra.mxu0 0.0
    %79 = vmatprep.subr.mxu0 0.0
    %80 = vmatpush1.msra.mxu0 0.0
    %81 = vmatprep.subr.mxu0 0.0
    %82 = vmatpush1.msra.mxu0 0.0
    %83 = vmatprep.subr.mxu0 0.0
    %84 = vmatpush1.msra.mxu0 0.0
    %85 = vmatprep.subr.mxu0 0.0
    %86 = vmatpush1.msra.mxu0 0.0
    %87 = vmatprep.subr.mxu0 0.0
    %88 = vmatpush1.msra.mxu0 0.0
    %89 = vmatprep.subr.mxu0 0.0
    %90 = vmatpush1.msra.mxu0 0.0
    %91 = vmatprep.subr.mxu0 0.0
    %92 = vmatpush1.msra.mxu0 0.0
    %93 = vmatprep.subr.mxu0 0.0
    %94 = vmatpush1.msra.mxu0 0.0
    %95 = vmatprep.subr.mxu0 0.0
    %96 = vmatpush1.msra.mxu0 0.0
    %97 = vmatprep.subr.mxu0 0.0
    %98 = vmatpush1.msra.mxu0 0.0
    %99 = vmatprep.subr.mxu0 0.0
    %100 = vmatpush1.msra.mxu0 0.0
    %101 = vmatprep.mubr.f32.mxu0 0.0
    %102 = vmatmul.mubr.f32.gmra.mrb[0].mxu0 %v35
    %v103 = vpop.f32.mrb[0].mxu0
    %v104 = vadd.f32 %v31, %v103
    %v105 = vpop.f32.mrb[0].mxu0
    %106 = vdwg.mxu0
    %v107 = vmax.f32 %v104, 0.0
    %v108 = vld [vmem:[%s3] sm:$0xff]
    %v109 = vld [vmem:[%s3 + $0x8] sm:$0xff]
    %v110 = vld [vmem:[%s3 + $0x10] sm:$0xff]
    %v111 = vld [vmem:[%s3 + $0x18] sm:$0xff]
    %v112 = vld [vmem:[%s3 + $0x20] sm:$0xff]
    %v113 = vld [vmem:[%s3 + $0x28] sm:$0xff]
    %v114 = vld [vmem:[%s3 + $0x30] sm:$0xff]
    %v115 = vld [vmem:[%s3 + $0x38] sm:$0xff]
    %v116 = vld [vmem:[%s4] sm:$0x1]
    %v118 = vlaneseq
    %v119 = vshrl.u32 %v118, 7
    %v120 = vsub.s32 0, %v119
    %v121 = vrot.slane %v116, %v120
    %vm123 = vcmask 523264
    %v125 = vsel %vm123, %v107, 0
    %127 = vmatprep.subr.mxu0 0.0
    %128 = vmatpush1.msra.mxu0 %v108
    %129 = vmatprep.subr.mxu0 0.0
    %130 = vmatpush1.msra.mxu0 %v109
    %131 = vmatprep.subr.mxu0 0.0
    %132 = vmatpush1.msra.mxu0 %v110
    %133 = vmatprep.subr.mxu0 0.0
    %134 = vmatpush1.msra.mxu0 %v111
    %135 = vmatprep.subr.mxu0 0.0
    %136 = vmatpush1.msra.mxu0 %v112
    %137 = vmatprep.subr.mxu0 0.0
    %138 = vmatpush1.msra.mxu0 %v113
    %139 = vmatprep.subr.mxu0 0.0
    %140 = vmatpush1.msra.mxu0 %v114
    %141 = vmatprep.subr.mxu0 0.0
    %142 = vmatpush1.msra.mxu0 %v115
    %143 = vmatprep.subr.mxu0 0.0
    %144 = vmatpush1.msra.mxu0 0.0
    %145 = vmatprep.subr.mxu0 0.0
    %146 = vmatpush1.msra.mxu0 0.0
    %147 = vmatprep.subr.mxu0 0.0
    %148 = vmatpush1.msra.mxu0 0.0
    %149 = vmatprep.subr.mxu0 0.0
    %150 = vmatpush1.msra.mxu0 0.0
    %151 = vmatprep.subr.mxu0 0.0
    %152 = vmatpush1.msra.mxu0 0.0
    %153 = vmatprep.subr.mxu0 0.0
    %154 = vmatpush1.msra.mxu0 0.0
    %155 = vmatprep.subr.mxu0 0.0
    %156 = vmatpush1.msra.mxu0 0.0
    %157 = vmatprep.subr.mxu0 0.0
    %158 = vmatpush1.msra.mxu0 0.0
    %159 = vmatprep.subr.mxu0 0.0
    %160 = vmatpush1.msra.mxu0 0.0
    %161 = vmatprep.subr.mxu0 0.0
    %162 = vmatpush1.msra.mxu0 0.0
    %163 = vmatprep.subr.mxu0 0.0
    %164 = vmatpush1.msra.mxu0 0.0
    %165 = vmatprep.subr.mxu0 0.0
    %166 = vmatpush1.msra.mxu0 0.0
    %167 = vmatprep.subr.mxu0 0.0
    %168 = vmatpush1.msra.mxu0 0.0
    %169 = vmatprep.subr.mxu0 0.0
    %170 = vmatpush1.msra.mxu0 0.0
    %171 = vmatprep.subr.mxu0 0.0
    %172 = vmatpush1.msra.mxu0 0.0
    %173 = vmatprep.subr.mxu0 0.0
    %174 = vmatpush1.msra.mxu0 0.0
    %175 = vmatprep.subr.mxu0 0.0
    %176 = vmatpush1.msra.mxu0 0.0
    %177 = vmatprep.subr.mxu0 0.0
    %178 = vmatpush1.msra.mxu0 0.0
    %179 = vmatprep.subr.mxu0 0.0
    %180 = vmatpush1.msra.mxu0 0.0
    %181 = vmatprep.subr.mxu0 0.0
    %182 = vmatpush1.msra.mxu0 0.0
    %183 = vmatprep.subr.mxu0 0.0
    %184 = vmatpush1.msra.mxu0 0.0
    %185 = vmatprep.subr.mxu0 0.0
    %186 = vmatpush1.msra.mxu0 0.0
    %187 = vmatprep.subr.mxu0 0.0
    %188 = vmatpush1.msra.mxu0 0.0
    %189 = vmatprep.subr.mxu0 0.0
    %190 = vmatpush1.msra.mxu0 0.0
    %191 = vmatprep.mubr.f32.mxu0 0.0
    %192 = vmatmul.mubr.f32.gmra.mrb[0].mxu0 %v125
    %v193 = vpop.f32.mrb[0].mxu0
    %v194 = vadd.f32 %v121, %v193
    %v195 = vpop.f32.mrb[0].mxu0
    %196 = vdwg.mxu0
    %vm197 = vcmask 130048
    %v198 = vsel %vm197, %v194, -inf
    %199 = vmax.xlane.f32.xlu0 %v198
    %v200 = vpop.xlane.xlu0 %199
    %v201 = vsub.f32 %v194, %v200
    %v202 = vmul.f32 %v201, 1.442695
    %v203 = vpow.pop %v202
    %v204 = vsel %vm197, %v203, 0.0
    %205 = vadd.xlane.f32.xlu0 %v204
    %v206 = vpop.xlane.xlu0 %205
    %v207 = vrcp.pop %v206
    %v208 = vmul.f32 %v203, %v207
    %209 = vst.msk [vmem:[#allocation2] sm:$0xff] %vm197, %v208
    // Predicated region
    $region22: #{tpu_custom_call.1} parent=1 // pred_check
      _
    $region23: #{tpu_custom_call.1} parent=1 // pred_check_branch
      %211 = sbr.rel (0) target = $region25
    $region24: #{tpu_custom_call.1} parent=1 // pred_region
      %s213 = ssub.s32 128, 128
      %214 = vsyncadd [#allocation3], %s213
      %s216 = sshll.u32 [#allocation2], 4
      %s217 = int_to_ptr.vmem [resolvable:$true] %s216
      %219 = dma.vmem_to_hbm [thread:$0]  %s217, 128, %s5, [#allocation3]
    $region25: #{tpu_custom_call.1} parent=1 // pred_fallthru
      _
    // Predicated region
    $region26: #{tpu_custom_call.1} parent=1 // pred_check
      _
    $region27: #{tpu_custom_call.1} parent=1 // pred_check_branch
      %221 = sbr.rel (0) target = $region29
    $region28: #{tpu_custom_call.1} parent=1 // pred_region
      %222 = dma.done [#allocation3], 128
    $region29: #{tpu_custom_call.1} parent=1 // pred_fallthru
      _
    %223 = vsyncpa [#allocation3], 1

</llo_original>
